<compile_context>
chip_gen: v5e
topology: v5e:2x2
jax: 0.10.0
libtpu: 0.0.40
codegen_flags: <defaults>
</compile_context>

<pallas_src>
import functools
import numpy as np
import jax
import jax.numpy as jnp
from jax import lax
from jax.experimental import pallas as pl
from jax.experimental.pallas import tpu as pltpu

BN_EPS = 0.001
_VMEM_LIMIT = 32 * 1024 * 1024  # safe on v5e (128 MiB), v6e (128 MiB), v7x (64 MiB)


def _pass1_kernel(xcat_ref, ws_ref, wa_ref, b_ref, y_ref, stats_ref, *, off):
    """One batch sequence per grid step.

    xcat : (T, Din)    concat([x shifted back by off, x], -1)  (Din = 2D)
    ws   : (Din, S)    semi-orthogonal bottleneck weight (no bias)
    wa   : (Kaff, Op)  affine weight, rows [0:S] act on h, [S:2S] on h_fut
    b    : (1, Op)     affine bias (zero-padded to lane-dense Op)
    y    : (T, Op)     pre-BN, post-ReLU activations
    stats: (2, Op)     per-sequence [sum; sum_sq] of y (for two-pass BN)
    """
    # Stage 1: semi-orthogonal linear (MXU).
    h = jnp.dot(xcat_ref[...], ws_ref[...], preferred_element_type=jnp.float32)

    if off != 0:
        T, S = h.shape
        # Stage 2: future-frame shift via XLU roll + zero mask past sequence end.
        h_fut = pltpu.roll(h, shift=(T - off) % T, axis=0)       # h_fut[t] = h[(t+off) % T]
        t_idx = lax.broadcasted_iota(jnp.int32, (T, S), 0)
        h_fut = jnp.where(t_idx < (T - off), h_fut, 0.0)
        hh = jnp.concatenate([h, h_fut], axis=-1)                # (T, 2S)
    else:
        hh = h

    # Stage 3: fused affine (single K = 2S matmul) + bias + ReLU.
    y = jnp.dot(hh, wa_ref[...], preferred_element_type=jnp.float32) + b_ref[...]
    y = jnp.maximum(y, 0.0)

    y_ref[...] = y
    s = jnp.sum(y, axis=0, keepdims=True)
    ss = jnp.sum(y * y, axis=0, keepdims=True)
    stats_ref[...] = jnp.concatenate([s, ss], axis=0)            # (2, Op)


def _pass2_kernel(y_ref, mean_ref, inv_ref, out_ref):
    """Lane-wise BatchNorm normalize: (y - mean) * rsqrt(var + eps)."""
    out_ref[...] = (y_ref[...] - mean_ref[...]) * inv_ref[...]


@functools.partial(jax.jit, static_argnames=("time_offset",))
def ftdnn_layer_forward(x, ws, wa, b, *, time_offset):
    """x: (B, T, D) f32.  ws: (2D, S).  wa: (2S, O).  b: (O,).  (torch weights transposed)."""
    B, T, D = x.shape
    off = time_offset
    Din, S = ws.shape
    Kaff, O = wa.shape
    if off != 0:
        assert Din == 2 * D and Kaff == 2 * S, "constructor contract: 2D in, 2S affine in"
    else:
        # off == 0: no shift/concat anywhere; affine acts directly on h.
        assert Din == D and Kaff == S, "time_offset=0 requires Din=D, affine_in=S"

    # ---- glue: input-side time shift + feature concat (data movement only) ----
    if off != 0:
        pad = jnp.repeat(x[:, :1, :], off, axis=1)               # first frame replicated
        x_shift = jnp.concatenate([pad, x], axis=1)[:, :T, :]    # x[max(t-off, 0)]
        x_cat = jnp.concatenate([x_shift, x], axis=-1)           # (B, T, 2D)
    else:
        x_cat = x
    x_cat = x_cat.astype(jnp.float32)

    # ---- lane-dense output padding (O -> multiple of 128) ----
    O_pad = max(128, ((O + 127) // 128) * 128)
    wa_p = jnp.zeros((Kaff, O_pad), jnp.float32).at[:, :O].set(wa.astype(jnp.float32))
    b_p = jnp.zeros((1, O_pad), jnp.float32).at[:, :O].set(b.astype(jnp.float32).reshape(1, O))
    ws_f = ws.astype(jnp.float32)

    flops = 2 * B * T * (Din * S + Kaff * O_pad)
    bytes_accessed = 4 * (B * T * Din + Din * S + Kaff * O_pad + O_pad
                          + 2 * B * T * O_pad + B * 2 * O_pad)

    # ---- pass 1: sorth + shift + affine + ReLU, per-sequence BN partials ----
    y_pre, stats = pl.pallas_call(
        functools.partial(_pass1_kernel, off=off),
        grid=(B,),
        in_specs=[
            pl.BlockSpec((None, T, Din), lambda i: (i, 0, 0)),
            pl.BlockSpec((Din, S), lambda i: (0, 0)),
            pl.BlockSpec((Kaff, O_pad), lambda i: (0, 0)),
            pl.BlockSpec((1, O_pad), lambda i: (0, 0)),
        ],
        out_specs=[
            pl.BlockSpec((None, T, O_pad), lambda i: (i, 0, 0)),
            pl.BlockSpec((None, 2, O_pad), lambda i: (i, 0, 0)),
        ],
        out_shape=[
            jax.ShapeDtypeStruct((B, T, O_pad), jnp.float32),
            jax.ShapeDtypeStruct((B, 2, O_pad), jnp.float32),
        ],
        compiler_params=pltpu.CompilerParams(
            dimension_semantics=("parallel",),
            vmem_limit_bytes=_VMEM_LIMIT),
        cost_estimate=pl.CostEstimate(
            flops=flops, transcendentals=0, bytes_accessed=bytes_accessed),
    )(x_cat, ws_f, wa_p, b_p)

    # ---- tiny (O,)-sized global stat reduction between passes (XLA glue) ----
    n = jnp.float32(B * T)
    tot = jnp.sum(stats, axis=0)                                 # (2, O_pad)
    mean = (tot[0] / n).reshape(1, O_pad)
    var = jnp.maximum(tot[1] / n - mean[0] * mean[0], 0.0).reshape(1, O_pad)
    inv = lax.rsqrt(var + BN_EPS)

    # ---- pass 2: lane-wise normalize (mem-bound, lane-dense) ----
    out = pl.pallas_call(
        _pass2_kernel,
        grid=(B,),
        in_specs=[
            pl.BlockSpec((None, T, O_pad), lambda i: (i, 0, 0)),
            pl.BlockSpec((1, O_pad), lambda i: (0, 0)),
            pl.BlockSpec((1, O_pad), lambda i: (0, 0)),
        ],
        out_specs=pl.BlockSpec((None, T, O_pad), lambda i: (i, 0, 0)),
        out_shape=jax.ShapeDtypeStruct((B, T, O_pad), jnp.float32),
        compiler_params=pltpu.CompilerParams(
            dimension_semantics=("parallel",),
            vmem_limit_bytes=_VMEM_LIMIT),
    )(y_pre, mean, inv)

    return out[:, :, :O]


def ftdnn_layer_reference(x, ws, wa, b, *, time_offset):
    """Pure-JAX mirror of the PyTorch forward (training-mode BN, dropout=identity)."""
    B, T, D = x.shape
    off = time_offset
    if off != 0:
        padding = x[:, 0, :][:, None, :]
        xd = jnp.concatenate([padding] * off + [x], axis=1)[:, :-off, :]
        x = jnp.concatenate([xd, x], axis=2)
    h = x @ ws                                                   # sorth (no bias)
    if off != 0:
        zpad = jnp.zeros((B, 1, h.shape[-1]), h.dtype)
        hd = jnp.concatenate([h] + [zpad] * off, axis=1)[:, off:, :]
        h = jnp.concatenate([h, hd], axis=2)
    y = h @ wa + b                                               # affine
    y = jnp.maximum(y, 0.0)                                      # ReLU
    mu = jnp.mean(y, axis=(0, 1), keepdims=True)
    var = jnp.mean((y - mu) ** 2, axis=(0, 1), keepdims=True)    # biased, training-mode BN
    return (y - mu) / jnp.sqrt(var + BN_EPS)


if __name__ == "__main__":
    # Small shapes consistent with the constructor contract:
    #   semi_orth_in_dim = 2*D, affine_in_dim = 2*semi_orth_out_dim.
    B, T, D = 2, 16, 16
    time_offset = 3
    semi_orth_in_dim = 2 * D               # 32
    semi_orth_out_dim = 16                 # bottleneck S
    affine_in_dim = 2 * semi_orth_out_dim  # 32
    out_dim = 32

    key = jax.random.PRNGKey(0)
    kx, kw1, kw2, kb = jax.random.split(key, 4)
    x = jax.random.normal(kx, (B, T, D), dtype=jnp.float32)
    # Parameters stored already transposed vs. torch (torch Linear weight is
    # (out, in); here (in, out) so forward is x @ W).
    ws = 0.1 * jax.random.normal(kw1, (semi_orth_in_dim, semi_orth_out_dim), dtype=jnp.float32)
    wa = 0.1 * jax.random.normal(kw2, (affine_in_dim, out_dim), dtype=jnp.float32)
    b = 0.1 * jax.random.normal(kb, (out_dim,), dtype=jnp.float32)

    out = ftdnn_layer_forward(x, ws, wa, b, time_offset=time_offset)
    out = jax.block_until_ready(out)

    ref = ftdnn_layer_reference(x, ws, wa, b, time_offset=time_offset)
    np.testing.assert_allclose(np.asarray(out), np.asarray(ref), atol=1e-4, rtol=1e-4)

    print("KERNEL_OK")
</pallas_src>

<mosaic_0001>
module attributes {stable_mosaic.version = 11 : i64} {
  func.func @_pass1_kernel(%arg0: i32, %arg1: memref<1x16x32xf32, #tpu.memory_space<vmem>>, %arg2: memref<32x16xf32, #tpu.memory_space<vmem>>, %arg3: memref<32x128xf32, #tpu.memory_space<vmem>>, %arg4: memref<1x128xf32, #tpu.memory_space<vmem>>, %arg5: memref<1x16x128xf32, #tpu.memory_space<vmem>>, %arg6: memref<1x2x128xf32, #tpu.memory_space<vmem>>) attributes {dimension_semantics = [#tpu.dimension_semantics<parallel>], iteration_bounds = array<i64: 2>, scalar_prefetch = 0 : i64, scratch_operands = 0 : i64, tpu.core_type = #tpu.core_type<tc>, window_params = [{transform_indices = @transform_0, window_bounds = array<i64: 1, 16, 32>}, {pipeline_mode = #tpu.pipeline_mode<synchronous>, transform_indices = @transform_1, window_bounds = array<i64: 32, 16>}, {pipeline_mode = #tpu.pipeline_mode<synchronous>, transform_indices = @transform_2, window_bounds = array<i64: 32, 128>}, {pipeline_mode = #tpu.pipeline_mode<synchronous>, transform_indices = @transform_3, window_bounds = array<i64: 1, 128>}, {transform_indices = @transform_4, window_bounds = array<i64: 1, 16, 128>}, {transform_indices = @transform_5, window_bounds = array<i64: 1, 2, 128>}]} {
    %c0 = arith.constant 0 : index
    %c0_0 = arith.constant 0 : index
    %c0_1 = arith.constant 0 : index
    %0 = vector.load %arg1[%c0, %c0_0, %c0_1] : memref<1x16x32xf32, #tpu.memory_space<vmem>>, vector<1x16x32xf32>
    %1 = vector.shape_cast %0 : vector<1x16x32xf32> to vector<16x32xf32>
    %c0_2 = arith.constant 0 : index
    %c0_3 = arith.constant 0 : index
    %2 = vector.load %arg2[%c0_2, %c0_3] : memref<32x16xf32, #tpu.memory_space<vmem>>, vector<32x16xf32>
    %cst = arith.constant dense<0.000000e+00> : vector<16x16xf32>
    %3 = tpu.matmul %1, %2, %cst {dimension_numbers = #tpu.dot_dimension_numbers<[1], [0], [0], [1], [0, 0, 1, 1], [], []>} : vector<16x32xf32>, vector<32x16xf32>, vector<16x16xf32> -> vector<16x16xf32>
    %c13_i32 = arith.constant 13 : i32
    %4 = tpu.dynamic_rotate %3 by %c13_i32 dim 0 : vector<16x16xf32>, i32 -> vector<16x16xf32>
    %5 = tpu.iota {dimensions = array<i32: 0>} : vector<16x16xi32>
    %c13_i32_4 = arith.constant 13 : i32
    %6 = vector.broadcast %c13_i32_4 : i32 to vector<16x16xi32>
    %7 = arith.cmpi slt, %5, %6 : vector<16x16xi32>
    %cst_5 = arith.constant 0.000000e+00 : f32
    %8 = vector.broadcast %cst_5 : f32 to vector<16x16xf32>
    %9 = arith.select %7, %4, %8 : vector<16x16xi1>, vector<16x16xf32>
    %10 = tpu.concatenate %3, %9 in 1 : vector<16x16xf32>, vector<16x16xf32> -> vector<16x32xf32>
    %c0_6 = arith.constant 0 : index
    %c0_7 = arith.constant 0 : index
    %11 = vector.load %arg3[%c0_6, %c0_7] : memref<32x128xf32, #tpu.memory_space<vmem>>, vector<32x128xf32>
    %cst_8 = arith.constant dense<0.000000e+00> : vector<16x128xf32>
    %12 = tpu.matmul %10, %11, %cst_8 {dimension_numbers = #tpu.dot_dimension_numbers<[1], [0], [0], [1], [0, 0, 1, 1], [], []>} : vector<16x32xf32>, vector<32x128xf32>, vector<16x128xf32> -> vector<16x128xf32>
    %c0_9 = arith.constant 0 : index
    %c0_10 = arith.constant 0 : index
    %13 = vector.load %arg4[%c0_9, %c0_10] : memref<1x128xf32, #tpu.memory_space<vmem>>, vector<1x128xf32>
    %14 = vector.broadcast %13 : vector<1x128xf32> to vector<16x128xf32>
    %15 = arith.addf %12, %14 : vector<16x128xf32>
    %cst_11 = arith.constant 0.000000e+00 : f32
    %16 = vector.broadcast %cst_11 : f32 to vector<16x128xf32>
    %17 = arith.maximumf %15, %16 : vector<16x128xf32>
    %c0_12 = arith.constant 0 : index
    %c0_13 = arith.constant 0 : index
    %c0_14 = arith.constant 0 : index
    %18 = vector.load %arg5[%c0_12, %c0_13, %c0_14] : memref<1x16x128xf32, #tpu.memory_space<vmem>>, vector<1x16x128xf32>
    %19 = vector.shape_cast %18 : vector<1x16x128xf32> to vector<16x128xf32>
    %20 = vector.shape_cast %17 : vector<16x128xf32> to vector<1x16x128xf32>
    tpu.vector_store %arg5[%c0_12, %c0_13, %c0_14], %20 {strides = array<i32>} : memref<1x16x128xf32, #tpu.memory_space<vmem>>, vector<1x16x128xf32>,
    %cst_15 = arith.constant dense<0.000000e+00> : vector<128xf32>
    %21 = vector.multi_reduction <add>, %17, %cst_15 [0] : vector<16x128xf32> to vector<128xf32>
    %22 = vector.shape_cast %21 : vector<128xf32> to vector<1x128xf32>
    %23 = arith.mulf %17, %17 : vector<16x128xf32>
    %cst_16 = arith.constant dense<0.000000e+00> : vector<128xf32>
    %24 = vector.multi_reduction <add>, %23, %cst_16 [0] : vector<16x128xf32> to vector<128xf32>
    %25 = vector.shape_cast %24 : vector<128xf32> to vector<1x128xf32>
    %26 = tpu.concatenate %22, %25 in 0 : vector<1x128xf32>, vector<1x128xf32> -> vector<2x128xf32>
    %c0_17 = arith.constant 0 : index
    %c0_18 = arith.constant 0 : index
    %c0_19 = arith.constant 0 : index
    %27 = vector.load %arg6[%c0_17, %c0_18, %c0_19] : memref<1x2x128xf32, #tpu.memory_space<vmem>>, vector<1x2x128xf32>
    %28 = vector.shape_cast %27 : vector<1x2x128xf32> to vector<2x128xf32>
    %29 = vector.shape_cast %26 : vector<2x128xf32> to vector<1x2x128xf32>
    tpu.vector_store %arg6[%c0_17, %c0_18, %c0_19], %29 {strides = array<i32>} : memref<1x2x128xf32, #tpu.memory_space<vmem>>, vector<1x2x128xf32>,
    return
  }
  func.func @transform_0(%arg0: i32) -> (i32, i32, i32) {
    %c0_i32 = arith.constant 0 : i32
    %c0_i32_0 = arith.constant 0 : i32
    %c0_i32_1 = arith.constant 0 : i32
    return %arg0, %c0_i32, %c0_i32_0 : i32, i32, i32
  }
  func.func @transform_1(%arg0: i32) -> (i32, i32) {
    %c0_i32 = arith.constant 0 : i32
    %c0_i32_0 = arith.constant 0 : i32
    %c0_i32_1 = arith.constant 0 : i32
    return %c0_i32, %c0_i32_0 : i32, i32
  }
  func.func @transform_2(%arg0: i32) -> (i32, i32) {
    %c0_i32 = arith.constant 0 : i32
    %c0_i32_0 = arith.constant 0 : i32
    %c0_i32_1 = arith.constant 0 : i32
    return %c0_i32, %c0_i32_0 : i32, i32
  }
  func.func @transform_3(%arg0: i32) -> (i32, i32) {
    %c0_i32 = arith.constant 0 : i32
    %c0_i32_0 = arith.constant 0 : i32
    %c0_i32_1 = arith.constant 0 : i32
    return %c0_i32, %c0_i32_0 : i32, i32
  }
  func.func @transform_4(%arg0: i32) -> (i32, i32, i32) {
    %c0_i32 = arith.constant 0 : i32
    %c0_i32_0 = arith.constant 0 : i32
    %c0_i32_1 = arith.constant 0 : i32
    return %arg0, %c0_i32, %c0_i32_0 : i32, i32, i32
  }
  func.func @transform_5(%arg0: i32) -> (i32, i32, i32) {
    %c0_i32 = arith.constant 0 : i32
    %c0_i32_0 = arith.constant 0 : i32
    %c0_i32_1 = arith.constant 0 : i32
    return %arg0, %c0_i32, %c0_i32_0 : i32, i32, i32
  }
}

module attributes {stable_mosaic.version = 11 : i64} {
  func.func @_pass2_kernel(%arg0: i32, %arg1: memref<1x16x128xf32, #tpu.memory_space<vmem>>, %arg2: memref<1x128xf32, #tpu.memory_space<vmem>>, %arg3: memref<1x128xf32, #tpu.memory_space<vmem>>, %arg4: memref<1x16x128xf32, #tpu.memory_space<vmem>>) attributes {dimension_semantics = [#tpu.dimension_semantics<parallel>], iteration_bounds = array<i64: 2>, scalar_prefetch = 0 : i64, scratch_operands = 0 : i64, tpu.core_type = #tpu.core_type<tc>, window_params = [{transform_indices = @transform_0, window_bounds = array<i64: 1, 16, 128>}, {pipeline_mode = #tpu.pipeline_mode<synchronous>, transform_indices = @transform_1, window_bounds = array<i64: 1, 128>}, {pipeline_mode = #tpu.pipeline_mode<synchronous>, transform_indices = @transform_2, window_bounds = array<i64: 1, 128>}, {transform_indices = @transform_3, window_bounds = array<i64: 1, 16, 128>}]} {
    %c0 = arith.constant 0 : index
    %c0_0 = arith.constant 0 : index
    %c0_1 = arith.constant 0 : index
    %0 = vector.load %arg1[%c0, %c0_0, %c0_1] : memref<1x16x128xf32, #tpu.memory_space<vmem>>, vector<1x16x128xf32>
    %1 = vector.shape_cast %0 : vector<1x16x128xf32> to vector<16x128xf32>
    %c0_2 = arith.constant 0 : index
    %c0_3 = arith.constant 0 : index
    %2 = vector.load %arg2[%c0_2, %c0_3] : memref<1x128xf32, #tpu.memory_space<vmem>>, vector<1x128xf32>
    %3 = vector.broadcast %2 : vector<1x128xf32> to vector<16x128xf32>
    %4 = arith.subf %1, %3 : vector<16x128xf32>
    %c0_4 = arith.constant 0 : index
    %c0_5 = arith.constant 0 : index
    %5 = vector.load %arg3[%c0_4, %c0_5] : memref<1x128xf32, #tpu.memory_space<vmem>>, vector<1x128xf32>
    %6 = vector.broadcast %5 : vector<1x128xf32> to vector<16x128xf32>
    %7 = arith.mulf %4, %6 : vector<16x128xf32>
    %c0_6 = arith.constant 0 : index
    %c0_7 = arith.constant 0 : index
    %c0_8 = arith.constant 0 : index
    %8 = vector.load %arg4[%c0_6, %c0_7, %c0_8] : memref<1x16x128xf32, #tpu.memory_space<vmem>>, vector<1x16x128xf32>
    %9 = vector.shape_cast %8 : vector<1x16x128xf32> to vector<16x128xf32>
    %10 = vector.shape_cast %7 : vector<16x128xf32> to vector<1x16x128xf32>
    tpu.vector_store %arg4[%c0_6, %c0_7, %c0_8], %10 {strides = array<i32>} : memref<1x16x128xf32, #tpu.memory_space<vmem>>, vector<1x16x128xf32>,
    return
  }
  func.func @transform_0(%arg0: i32) -> (i32, i32, i32) {
    %c0_i32 = arith.constant 0 : i32
    %c0_i32_0 = arith.constant 0 : i32
    %c0_i32_1 = arith.constant 0 : i32
    return %arg0, %c0_i32, %c0_i32_0 : i32, i32, i32
  }
  func.func @transform_1(%arg0: i32) -> (i32, i32) {
    %c0_i32 = arith.constant 0 : i32
    %c0_i32_0 = arith.constant 0 : i32
    %c0_i32_1 = arith.constant 0 : i32
    return %c0_i32, %c0_i32_0 : i32, i32
  }
  func.func @transform_2(%arg0: i32) -> (i32, i32) {
    %c0_i32 = arith.constant 0 : i32
    %c0_i32_0 = arith.constant 0 : i32
    %c0_i32_1 = arith.constant 0 : i32
    return %c0_i32, %c0_i32_0 : i32, i32
  }
  func.func @transform_3(%arg0: i32) -> (i32, i32, i32) {
    %c0_i32 = arith.constant 0 : i32
    %c0_i32_0 = arith.constant 0 : i32
    %c0_i32_1 = arith.constant 0 : i32
    return %arg0, %c0_i32, %c0_i32_0 : i32, i32, i32
  }
}

</mosaic_0001>

<llo_original>
// kernel: ftdnn_layer_forward.3
$region0: #{ftdnn_layer_forward.3}
  #allocation0 [shape = 'u32[]', space=smem, size = 0x4, offset = 0x4, fixed_abs, tag = 'smem constant byte address 0x4 - core index']
  #allocation1 [shape = 'u32[72,128]{1,0:T(1,128)}', space=vmem, size = 0x9000, scoped, tag = 'internal scratch']
  %s0 = inlined_call_operand.vmem [shape: f32[2,16,128], index: 0, kind: input, shape index: {}]
  %s1 = inlined_call_operand.vmem [shape: f32[1,128], index: 1, kind: input, shape index: {}]
  %s2 = inlined_call_operand.vmem [shape: f32[1,128], index: 2, kind: input, shape index: {}]
  %s3 = inlined_call_operand.hbm [shape: f32[2,16,128], index: 3, kind: output, shape index: {}]
  %s4 = sld [smem:[#allocation0]]
  $region45: #{ftdnn_layer_forward.3} parent=0
    _
  %s6 = ssub.s32 1, %s4
  %s7 = scalar_select 0, %s6, %s4
  $region1: #{ftdnn_layer_forward.3} parent=0
    #allocation2 [shape = 'u8[16384]{0}', space=vmem, size = 0x4000, scoped, tag = 'output window, operand 0']
    #allocation3 [shape = 's32[2]{0}', space=sflag, size = 0x8, scoped, tag = 'scoped memory for ftdnn_layer_forward.3']
    %8 = vsyncpa [#allocation3], 0
    %s9 = scalar_lea.sflag [#allocation3], 1
    %10 = vsyncpa %s9, 0
    loop: start=0, step=1, limit=4
    $region2: #{ftdnn_layer_forward.3} parent=1 // loop_pre_header
      _
    $region3: #{ftdnn_layer_forward.3} parent=1 // loop_header
      %s12 = sphi 0, %s16
      %p13 = scmp.ge.s32.totalorder %s12, 4
      %s22 = sphi 0, %s24
      %s25 = sphi 0, %s22
      %s26 = sphi 0, %s25
      %s42 = sphi 0, %s26
      %s46 = sphi 0, %s46
      %s48 = sphi 0, %s46
      %s49 = sphi 0, %s48
      %s63 = sphi 0, %s49
      %s67 = sphi 0, %s67
      %s69 = sphi 0, %s67
      %s70 = sphi 0, %s69
      %s84 = sphi 0, %s70
      %s90 = sphi 0, %s92
      %s93 = sphi 0, %s90
      %s94 = sphi 0, %s93
      %s110 = sphi 0, %s94
    $region4: #{ftdnn_layer_forward.3} parent=1 // loop_header_branch
      %15 = sbr.rel (%p13) target = $region8
    $region5: #{ftdnn_layer_forward.3} parent=1 // loop_body
      %s17 = ssub.s32 %s12, 1
      %s18 = ssub.s32 %s12, 2
      %s19 = sadd.s32 %s12, 1
      %s20 = ssub.s32 %s12, %s19
      %p21 = scmp.eq.s32.totalorder %s20, 0
      %s23 = sadd.s32 %s22, 1
      %s24 = scalar_select %p21, %s22, %s23
      %p27 = pneg %p21
      %p28 = scmp.eq.s32.totalorder %s12, 1
      %p29 = por %p27, %p28
      %p30 = scmp.ne.s32.totalorder %s22, %s25
      %p31 = scmp.eq.s32.totalorder %s12, 0
      %p32 = por %p30, %p31
      %p33 = scmp.ne.s32.totalorder %s22, %s25
      %p34 = scmp.eq.s32.totalorder %s17, 1
      %p35 = por %p33, %p34
      %p36 = scmp.ne.s32.totalorder %s25, %s26
      %p37 = scmp.eq.s32.totalorder %s17, 0
      %p38 = por %p36, %p37
      %p39 = scmp.ne.s32.totalorder %s25, %s26
      %p40 = scmp.eq.s32.totalorder %s18, 1
      %p41 = por %p39, %p40
      %p43 = scmp.ne.s32.totalorder %s26, %s42
      %p44 = scmp.eq.s32.totalorder %s18, 0
      %p45 = por %p43, %p44
      %s47 = sadd.s32 %s46, 1
      %p50 = scmp.eq.s32.totalorder %s12, 1
      %p51 = scmp.ne.s32.totalorder %s46, %s48
      %p52 = scmp.eq.s32.totalorder %s12, 0
      %p53 = por %p51, %p52
      %p54 = scmp.ne.s32.totalorder %s46, %s48
      %p55 = scmp.eq.s32.totalorder %s17, 1
      %p56 = por %p54, %p55
      %p57 = scmp.ne.s32.totalorder %s48, %s49
      %p58 = scmp.eq.s32.totalorder %s17, 0
      %p59 = por %p57, %p58
      %p60 = scmp.ne.s32.totalorder %s48, %s49
      %p61 = scmp.eq.s32.totalorder %s18, 1
      %p62 = por %p60, %p61
      %p64 = scmp.ne.s32.totalorder %s49, %s63
      %p65 = scmp.eq.s32.totalorder %s18, 0
      %p66 = por %p64, %p65
      %s68 = sadd.s32 %s67, 1
      %p71 = scmp.eq.s32.totalorder %s12, 1
      %p72 = scmp.ne.s32.totalorder %s67, %s69
      %p73 = scmp.eq.s32.totalorder %s12, 0
      %p74 = por %p72, %p73
      %p75 = scmp.ne.s32.totalorder %s67, %s69
      %p76 = scmp.eq.s32.totalorder %s17, 1
      %p77 = por %p75, %p76
      %p78 = scmp.ne.s32.totalorder %s69, %s70
      %p79 = scmp.eq.s32.totalorder %s17, 0
      %p80 = por %p78, %p79
      %p81 = scmp.ne.s32.totalorder %s69, %s70
      %p82 = scmp.eq.s32.totalorder %s18, 1
      %p83 = por %p81, %p82
      %p85 = scmp.ne.s32.totalorder %s70, %s84
      %p86 = scmp.eq.s32.totalorder %s18, 0
      %p87 = por %p85, %p86
      %s88 = ssub.s32 %s12, %s19
      %p89 = scmp.eq.s32.totalorder %s88, 0
      %s91 = sadd.s32 %s90, 1
      %s92 = scalar_select %p89, %s90, %s91
      %p95 = pneg %p89
      %p96 = scmp.eq.s32.totalorder %s12, 1
      %p97 = por %p95, %p96
      %p98 = scmp.ne.s32.totalorder %s90, %s93
      %p99 = scmp.eq.s32.totalorder %s12, 0
      %p100 = por %p98, %p99
      %p101 = scmp.ne.s32.totalorder %s90, %s93
      %p102 = scmp.eq.s32.totalorder %s17, 1
      %p103 = por %p101, %p102
      %p104 = scmp.ne.s32.totalorder %s93, %s94
      %p105 = scmp.eq.s32.totalorder %s17, 0
      %p106 = por %p104, %p105
      %p107 = scmp.ne.s32.totalorder %s93, %s94
      %p108 = scmp.eq.s32.totalorder %s18, 1
      %p109 = por %p107, %p108
      %p111 = scmp.ne.s32.totalorder %s94, %s110
      %p112 = scmp.eq.s32.totalorder %s18, 0
      %p113 = por %p111, %p112
      %p114 = scmp.le.s32.totalorder 1, %s12
      %p115 = scmp.lt.s32.totalorder %s12, 3
      %p116 = pnand %p114, %p115
      %p117 = pneg %p116
      // Predicated region
      $region9: #{ftdnn_layer_forward.3} parent=5 // pred_check
        _
      $region10: #{ftdnn_layer_forward.3} parent=5 // pred_check_branch
        %119 = sbr.rel (%p116) target = $region12
      $region11: #{ftdnn_layer_forward.3} parent=5 // pred_region
        %s120 = ssub.s32 %s12, 1
        // Predicated region
        $region13: #{ftdnn_layer_forward.3} parent=11 // pred_check
          %p121 = pneg %p59
        $region14: #{ftdnn_layer_forward.3} parent=11 // pred_check_branch
          %123 = sbr.rel (%p121) target = $region16
        $region15: #{ftdnn_layer_forward.3} parent=11 // pred_region
          _
        $region16: #{ftdnn_layer_forward.3} parent=11 // pred_fallthru
          _
        // Predicated region
        $region17: #{ftdnn_layer_forward.3} parent=11 // pred_check
          %p124 = pneg %p80
        $region18: #{ftdnn_layer_forward.3} parent=11 // pred_check_branch
          %126 = sbr.rel (%p124) target = $region20
        $region19: #{ftdnn_layer_forward.3} parent=11 // pred_region
          _
        $region20: #{ftdnn_layer_forward.3} parent=11 // pred_fallthru
          _
      $region12: #{ftdnn_layer_forward.3} parent=5 // pred_fallthru
        _
      %p127 = scmp.lt.s32.totalorder %s12, 2
      // Predicated region
      $region21: #{ftdnn_layer_forward.3} parent=5 // pred_check
        %p128 = pneg %p127
      $region22: #{ftdnn_layer_forward.3} parent=5 // pred_check_branch
        %130 = sbr.rel (%p128) target = $region24
      $region23: #{ftdnn_layer_forward.3} parent=5 // pred_region
        // Predicated region
        $region25: #{ftdnn_layer_forward.3} parent=23 // pred_check
          %p131 = pneg %p32
        $region26: #{ftdnn_layer_forward.3} parent=23 // pred_check_branch
          %133 = sbr.rel (%p131) target = $region28
        $region27: #{ftdnn_layer_forward.3} parent=23 // pred_region
          %p134 = scmp.lt.s32.totalorder %s12, 1
          %s135 = scalar_select %p134, %s12, 1
          %s136 = smul.addr %s135, 2
          %s137 = smul.addr %s136, 8
          %s138 = scalar_lea.vmem %s0, %s137
        $region28: #{ftdnn_layer_forward.3} parent=23 // pred_fallthru
          _
      $region24: #{ftdnn_layer_forward.3} parent=5 // pred_fallthru
        _
      %p139 = scmp.le.s32.totalorder 1, %s12
      %p140 = scmp.lt.s32.totalorder %s12, 3
      %p141 = pnand %p139, %p140
      %p142 = pneg %p141
      // Predicated region
      $region29: #{ftdnn_layer_forward.3} parent=5 // pred_check
        _
      $region30: #{ftdnn_layer_forward.3} parent=5 // pred_check_branch
        %144 = sbr.rel (%p141) target = $region32
      $region31: #{ftdnn_layer_forward.3} parent=5 // pred_region
        %s145 = ssub.s32 %s12, 1
        %p146 = scmp.lt.s32.totalorder %s17, 1
        %s147 = scalar_select %p146, %s17, 1
        %s148 = smul.addr %s147, 2
        %s149 = smul.addr %s148, 8
        %s150 = scalar_lea.vmem %s0, %s149
        %p151 = pneg %p38
        %p152 = pneg %p35
        %p153 = pneg %p59
        %p154 = pneg %p56
        %p155 = pneg %p80
        %p156 = pneg %p77
        %p157 = pneg %p106
        %p158 = pneg %p103
        %s159 = sand.u32 %s93, 1
        %s160 = scalar_lea.sflag [#allocation3], %s159
        %s161 = sand.u32 %s93, 1
        %s162 = smul.addr %s161, 16
        %s163 = scalar_lea.vmem [#allocation2], %s162
        %p164 = scmp.lt.s32.totalorder %s17, 1
        %s165 = scalar_select %p164, %s17, 1
        %s166 = smul.addr %s165, 2
        %s167 = smul.addr %s166, 8
        %s168 = scalar_lea.vmem %s0, %s167
        %v169 = vld [vmem:[%s168] sm:$0xff]
        %v170 = vld [vmem:[%s168 + $0x8] sm:$0xff]
        %v171 = vld [vmem:[%s1] sm:$0x1]
        %v173 = vperm.slane %v171, 0
        %v175 = vsub.f32 %v169, %v173
        %v176 = vsub.f32 %v170, %v173
        %v177 = vld [vmem:[%s2] sm:$0x1]
        %v179 = vperm.slane %v177, 0
        %v181 = vmul.f32 %v175, %v179
        %v182 = vmul.f32 %v176, %v179
        %183 = vst [vmem:[%s163] sm:$0xff] %v181
        %184 = vst [vmem:[%s163 + $0x8] sm:$0xff] %v182
        %s185 = sand.u32 %s93, 1
        %s186 = scalar_lea.sflag [#allocation3], %s185
        %s187 = sand.u32 %s93, 1
        %s188 = smul.addr %s187, 16
        %s189 = scalar_lea.vmem [#allocation2], %s188
        // Predicated region
        $region33: #{ftdnn_layer_forward.3} parent=31 // pred_check
          %p190 = pneg %p103
        $region34: #{ftdnn_layer_forward.3} parent=31 // pred_check_branch
          %192 = sbr.rel (%p190) target = $region36
        $region35: #{ftdnn_layer_forward.3} parent=31 // pred_region
          %194 = vsyncadd %s186, 0
          %s195 = smul.addr %s17, 2
          %s196 = smul.addr %s195, 8
          %s197 = scalar_lea.hbm %s3, %s196
          %s198 = sshll.u32 %s189, 4
          %s199 = int_to_ptr.vmem [resolvable:$true] %s198
          %s200 = sshll.u32 %s197, 4
          %s201 = int_to_ptr.hbm [resolvable:$true] %s200
          %206 = dma.vmem_to_hbm [thread:$0]  %s199, 256, %s201, %s186, 128, 128, 8
        $region36: #{ftdnn_layer_forward.3} parent=31 // pred_fallthru
          _
      $region32: #{ftdnn_layer_forward.3} parent=5 // pred_fallthru
        _
      %p207 = scmp.le.s32.totalorder 2, %s12
      // Predicated region
      $region37: #{ftdnn_layer_forward.3} parent=5 // pred_check
        %p208 = pneg %p207
      $region38: #{ftdnn_layer_forward.3} parent=5 // pred_check_branch
        %210 = sbr.rel (%p208) target = $region40
      $region39: #{ftdnn_layer_forward.3} parent=5 // pred_region
        %s211 = ssub.s32 %s12, 2
        // Predicated region
        $region41: #{ftdnn_layer_forward.3} parent=39 // pred_check
          %p212 = pneg %p109
        $region42: #{ftdnn_layer_forward.3} parent=39 // pred_check_branch
          %214 = sbr.rel (%p212) target = $region44
        $region43: #{ftdnn_layer_forward.3} parent=39 // pred_region
          %s215 = sand.u32 %s94, 1
          %s216 = scalar_lea.sflag [#allocation3], %s215
          %s217 = sand.u32 %s94, 1
          %s218 = smul.addr %s217, 16
          %s219 = scalar_lea.vmem [#allocation2], %s218
          %221 = dma.done %s216, 256
        $region44: #{ftdnn_layer_forward.3} parent=39 // pred_fallthru
          _
      $region40: #{ftdnn_layer_forward.3} parent=5 // pred_fallthru
        _
    $region6: #{ftdnn_layer_forward.3} parent=1 // loop_footer
      %s16 = sadd.s32 1, %s12
    $region7: #{ftdnn_layer_forward.3} parent=1 // loop_footer_branch
      %11 = sbr.rel target = $region3
    $region8: #{ftdnn_layer_forward.3} parent=1 // loop_exit
      _
    %222 = vsyncpa [#allocation3], 1
    %s223 = scalar_lea.sflag [#allocation3], 1
    %224 = vsyncpa %s223, 1

// kernel: ftdnn_layer_forward.2
$region0: #{ftdnn_layer_forward.2}
  #allocation0 [shape = 'u32[]', space=smem, size = 0x4, offset = 0x4, fixed_abs, tag = 'smem constant byte address 0x4 - core index']
  #allocation1 [shape = 'u32[72,128]{1,0:T(1,128)}', space=vmem, size = 0x9000, scoped, tag = 'internal scratch']
  %s0 = inlined_call_operand.vmem [shape: f32[2,16,32], index: 0, kind: input, shape index: {}]
  %s1 = inlined_call_operand.vmem [shape: f32[32,16], index: 1, kind: input, shape index: {}]
  %s2 = inlined_call_operand.vmem [shape: f32[32,128], index: 2, kind: input, shape index: {}]
  %s3 = inlined_call_operand.vmem [shape: f32[1,128], index: 3, kind: input, shape index: {}]
  %s4 = inlined_call_operand.vmem [shape: f32[2,16,128], index: 4, kind: output, shape index: {0}]
  %s5 = inlined_call_operand.vmem [shape: f32[2,2,128], index: 5, kind: output, shape index: {1}]
  %6 = xla_tuple %s4, %s5
  %s7 = sld [smem:[#allocation0]]
  $region57: #{ftdnn_layer_forward.2} parent=0
    _
  %s9 = ssub.s32 1, %s7
  %s10 = scalar_select 0, %s9, %s7
  loop: start=0, step=1, limit=4
  $region2: #{ftdnn_layer_forward.2} parent=0 // loop_pre_header
    _
  $region3: #{ftdnn_layer_forward.2} parent=0 // loop_header
    %s12 = sphi 0, %s16
    %p13 = scmp.ge.s32.totalorder %s12, 4
    %s22 = sphi 0, %s24
    %s25 = sphi 0, %s22
    %s26 = sphi 0, %s25
    %s42 = sphi 0, %s26
    %s46 = sphi 0, %s46
    %s48 = sphi 0, %s46
    %s49 = sphi 0, %s48
    %s63 = sphi 0, %s49
    %s67 = sphi 0, %s67
    %s69 = sphi 0, %s67
    %s70 = sphi 0, %s69
    %s84 = sphi 0, %s70
    %s88 = sphi 0, %s88
    %s90 = sphi 0, %s88
    %s91 = sphi 0, %s90
    %s105 = sphi 0, %s91
    %s111 = sphi 0, %s113
    %s114 = sphi 0, %s111
    %s115 = sphi 0, %s114
    %s131 = sphi 0, %s115
    %s137 = sphi 0, %s139
    %s140 = sphi 0, %s137
    %s141 = sphi 0, %s140
    %s157 = sphi 0, %s141
  $region4: #{ftdnn_layer_forward.2} parent=0 // loop_header_branch
    %15 = sbr.rel (%p13) target = $region8
  $region5: #{ftdnn_layer_forward.2} parent=0 // loop_body
    %s17 = ssub.s32 %s12, 1
    %s18 = ssub.s32 %s12, 2
    %s19 = sadd.s32 %s12, 1
    %s20 = ssub.s32 %s12, %s19
    %p21 = scmp.eq.s32.totalorder %s20, 0
    %s23 = sadd.s32 %s22, 1
    %s24 = scalar_select %p21, %s22, %s23
    %p27 = pneg %p21
    %p28 = scmp.eq.s32.totalorder %s12, 1
    %p29 = por %p27, %p28
    %p30 = scmp.ne.s32.totalorder %s22, %s25
    %p31 = scmp.eq.s32.totalorder %s12, 0
    %p32 = por %p30, %p31
    %p33 = scmp.ne.s32.totalorder %s22, %s25
    %p34 = scmp.eq.s32.totalorder %s17, 1
    %p35 = por %p33, %p34
    %p36 = scmp.ne.s32.totalorder %s25, %s26
    %p37 = scmp.eq.s32.totalorder %s17, 0
    %p38 = por %p36, %p37
    %p39 = scmp.ne.s32.totalorder %s25, %s26
    %p40 = scmp.eq.s32.totalorder %s18, 1
    %p41 = por %p39, %p40
    %p43 = scmp.ne.s32.totalorder %s26, %s42
    %p44 = scmp.eq.s32.totalorder %s18, 0
    %p45 = por %p43, %p44
    %s47 = sadd.s32 %s46, 1
    %p50 = scmp.eq.s32.totalorder %s12, 1
    %p51 = scmp.ne.s32.totalorder %s46, %s48
    %p52 = scmp.eq.s32.totalorder %s12, 0
    %p53 = por %p51, %p52
    %p54 = scmp.ne.s32.totalorder %s46, %s48
    %p55 = scmp.eq.s32.totalorder %s17, 1
    %p56 = por %p54, %p55
    %p57 = scmp.ne.s32.totalorder %s48, %s49
    %p58 = scmp.eq.s32.totalorder %s17, 0
    %p59 = por %p57, %p58
    %p60 = scmp.ne.s32.totalorder %s48, %s49
    %p61 = scmp.eq.s32.totalorder %s18, 1
    %p62 = por %p60, %p61
    %p64 = scmp.ne.s32.totalorder %s49, %s63
    %p65 = scmp.eq.s32.totalorder %s18, 0
    %p66 = por %p64, %p65
    %s68 = sadd.s32 %s67, 1
    %p71 = scmp.eq.s32.totalorder %s12, 1
    %p72 = scmp.ne.s32.totalorder %s67, %s69
    %p73 = scmp.eq.s32.totalorder %s12, 0
    %p74 = por %p72, %p73
    %p75 = scmp.ne.s32.totalorder %s67, %s69
    %p76 = scmp.eq.s32.totalorder %s17, 1
    %p77 = por %p75, %p76
    %p78 = scmp.ne.s32.totalorder %s69, %s70
    %p79 = scmp.eq.s32.totalorder %s17, 0
    %p80 = por %p78, %p79
    %p81 = scmp.ne.s32.totalorder %s69, %s70
    %p82 = scmp.eq.s32.totalorder %s18, 1
    %p83 = por %p81, %p82
    %p85 = scmp.ne.s32.totalorder %s70, %s84
    %p86 = scmp.eq.s32.totalorder %s18, 0
    %p87 = por %p85, %p86
    %s89 = sadd.s32 %s88, 1
    %p92 = scmp.eq.s32.totalorder %s12, 1
    %p93 = scmp.ne.s32.totalorder %s88, %s90
    %p94 = scmp.eq.s32.totalorder %s12, 0
    %p95 = por %p93, %p94
    %p96 = scmp.ne.s32.totalorder %s88, %s90
    %p97 = scmp.eq.s32.totalorder %s17, 1
    %p98 = por %p96, %p97
    %p99 = scmp.ne.s32.totalorder %s90, %s91
    %p100 = scmp.eq.s32.totalorder %s17, 0
    %p101 = por %p99, %p100
    %p102 = scmp.ne.s32.totalorder %s90, %s91
    %p103 = scmp.eq.s32.totalorder %s18, 1
    %p104 = por %p102, %p103
    %p106 = scmp.ne.s32.totalorder %s91, %s105
    %p107 = scmp.eq.s32.totalorder %s18, 0
    %p108 = por %p106, %p107
    %s109 = ssub.s32 %s12, %s19
    %p110 = scmp.eq.s32.totalorder %s109, 0
    %s112 = sadd.s32 %s111, 1
    %s113 = scalar_select %p110, %s111, %s112
    %p116 = pneg %p110
    %p117 = scmp.eq.s32.totalorder %s12, 1
    %p118 = por %p116, %p117
    %p119 = scmp.ne.s32.totalorder %s111, %s114
    %p120 = scmp.eq.s32.totalorder %s12, 0
    %p121 = por %p119, %p120
    %p122 = scmp.ne.s32.totalorder %s111, %s114
    %p123 = scmp.eq.s32.totalorder %s17, 1
    %p124 = por %p122, %p123
    %p125 = scmp.ne.s32.totalorder %s114, %s115
    %p126 = scmp.eq.s32.totalorder %s17, 0
    %p127 = por %p125, %p126
    %p128 = scmp.ne.s32.totalorder %s114, %s115
    %p129 = scmp.eq.s32.totalorder %s18, 1
    %p130 = por %p128, %p129
    %p132 = scmp.ne.s32.totalorder %s115, %s131
    %p133 = scmp.eq.s32.totalorder %s18, 0
    %p134 = por %p132, %p133
    %s135 = ssub.s32 %s12, %s19
    %p136 = scmp.eq.s32.totalorder %s135, 0
    %s138 = sadd.s32 %s137, 1
    %s139 = scalar_select %p136, %s137, %s138
    %p142 = pneg %p136
    %p143 = scmp.eq.s32.totalorder %s12, 1
    %p144 = por %p142, %p143
    %p145 = scmp.ne.s32.totalorder %s137, %s140
    %p146 = scmp.eq.s32.totalorder %s12, 0
    %p147 = por %p145, %p146
    %p148 = scmp.ne.s32.totalorder %s137, %s140
    %p149 = scmp.eq.s32.totalorder %s17, 1
    %p150 = por %p148, %p149
    %p151 = scmp.ne.s32.totalorder %s140, %s141
    %p152 = scmp.eq.s32.totalorder %s17, 0
    %p153 = por %p151, %p152
    %p154 = scmp.ne.s32.totalorder %s140, %s141
    %p155 = scmp.eq.s32.totalorder %s18, 1
    %p156 = por %p154, %p155
    %p158 = scmp.ne.s32.totalorder %s141, %s157
    %p159 = scmp.eq.s32.totalorder %s18, 0
    %p160 = por %p158, %p159
    %p161 = scmp.le.s32.totalorder 1, %s12
    %p162 = scmp.lt.s32.totalorder %s12, 3
    %p163 = pnand %p161, %p162
    %p164 = pneg %p163
    // Predicated region
    $region9: #{ftdnn_layer_forward.2} parent=5 // pred_check
      _
    $region10: #{ftdnn_layer_forward.2} parent=5 // pred_check_branch
      %166 = sbr.rel (%p163) target = $region12
    $region11: #{ftdnn_layer_forward.2} parent=5 // pred_region
      %s167 = ssub.s32 %s12, 1
      // Predicated region
      $region13: #{ftdnn_layer_forward.2} parent=11 // pred_check
        %p168 = pneg %p59
      $region14: #{ftdnn_layer_forward.2} parent=11 // pred_check_branch
        %170 = sbr.rel (%p168) target = $region16
      $region15: #{ftdnn_layer_forward.2} parent=11 // pred_region
        _
      $region16: #{ftdnn_layer_forward.2} parent=11 // pred_fallthru
        _
      // Predicated region
      $region17: #{ftdnn_layer_forward.2} parent=11 // pred_check
        %p171 = pneg %p80
      $region18: #{ftdnn_layer_forward.2} parent=11 // pred_check_branch
        %173 = sbr.rel (%p171) target = $region20
      $region19: #{ftdnn_layer_forward.2} parent=11 // pred_region
        _
      $region20: #{ftdnn_layer_forward.2} parent=11 // pred_fallthru
        _
      // Predicated region
      $region21: #{ftdnn_layer_forward.2} parent=11 // pred_check
        %p174 = pneg %p101
      $region22: #{ftdnn_layer_forward.2} parent=11 // pred_check_branch
        %176 = sbr.rel (%p174) target = $region24
      $region23: #{ftdnn_layer_forward.2} parent=11 // pred_region
        _
      $region24: #{ftdnn_layer_forward.2} parent=11 // pred_fallthru
        _
    $region12: #{ftdnn_layer_forward.2} parent=5 // pred_fallthru
      _
    %p177 = scmp.lt.s32.totalorder %s12, 2
    // Predicated region
    $region25: #{ftdnn_layer_forward.2} parent=5 // pred_check
      %p178 = pneg %p177
    $region26: #{ftdnn_layer_forward.2} parent=5 // pred_check_branch
      %180 = sbr.rel (%p178) target = $region28
    $region27: #{ftdnn_layer_forward.2} parent=5 // pred_region
      // Predicated region
      $region29: #{ftdnn_layer_forward.2} parent=27 // pred_check
        %p181 = pneg %p32
      $region30: #{ftdnn_layer_forward.2} parent=27 // pred_check_branch
        %183 = sbr.rel (%p181) target = $region32
      $region31: #{ftdnn_layer_forward.2} parent=27 // pred_region
        %p184 = scmp.lt.s32.totalorder %s12, 1
        %s185 = scalar_select %p184, %s12, 1
        %s186 = smul.addr %s185, 2
        %s187 = smul.addr %s186, 8
        %s188 = scalar_lea.vmem %s0, %s187
      $region32: #{ftdnn_layer_forward.2} parent=27 // pred_fallthru
        _
    $region28: #{ftdnn_layer_forward.2} parent=5 // pred_fallthru
      _
    %p189 = scmp.le.s32.totalorder 1, %s12
    %p190 = scmp.lt.s32.totalorder %s12, 3
    %p191 = pnand %p189, %p190
    %p192 = pneg %p191
    // Predicated region
    $region33: #{ftdnn_layer_forward.2} parent=5 // pred_check
      _
    $region34: #{ftdnn_layer_forward.2} parent=5 // pred_check_branch
      %194 = sbr.rel (%p191) target = $region36
    $region35: #{ftdnn_layer_forward.2} parent=5 // pred_region
      %s195 = ssub.s32 %s12, 1
      %p196 = scmp.lt.s32.totalorder %s17, 1
      %s197 = scalar_select %p196, %s17, 1
      %s198 = smul.addr %s197, 2
      %s199 = smul.addr %s198, 8
      %s200 = scalar_lea.vmem %s0, %s199
      %p201 = pneg %p38
      %p202 = pneg %p35
      %p203 = pneg %p59
      %p204 = pneg %p56
      %p205 = pneg %p80
      %p206 = pneg %p77
      %p207 = pneg %p101
      %p208 = pneg %p98
      %p209 = pneg %p127
      %p210 = pneg %p124
      %p211 = scmp.lt.s32.totalorder %s17, 1
      %s212 = scalar_select %p211, %s17, 1
      %s213 = smul.addr %s212, 2
      %s214 = smul.addr %s213, 8
      %s215 = scalar_lea.vmem %s4, %s214
      %p216 = pneg %p153
      %p217 = pneg %p150
      %p218 = scmp.lt.s32.totalorder %s17, 1
      %s219 = scalar_select %p218, %s17, 1
      %s220 = smul.addr %s219, 2
      %s221 = scalar_lea.vmem %s5, %s220
      %p222 = scmp.lt.s32.totalorder %s17, 1
      %s223 = scalar_select %p222, %s17, 1
      %s224 = smul.addr %s223, 2
      %s225 = smul.addr %s224, 8
      %s226 = scalar_lea.vmem %s0, %s225
      %p227 = scmp.lt.s32.totalorder %s17, 1
      %s228 = scalar_select %p227, %s17, 1
      %s229 = smul.addr %s228, 2
      %s230 = smul.addr %s229, 8
      %s231 = scalar_lea.vmem %s4, %s230
      %p232 = scmp.lt.s32.totalorder %s17, 1
      %s233 = scalar_select %p232, %s17, 1
      %s234 = smul.addr %s233, 2
      %s235 = scalar_lea.vmem %s5, %s234
      %v236 = vld [vmem:[%s226] sm:$0xff]
      %v237 = vld [vmem:[%s226 + $0x8] sm:$0xff]
      %v238 = vld [vmem:[%s1] sm:$0xff]
      %v239 = vld [vmem:[%s1 + $0x8] sm:$0xff]
      %v240 = vld [vmem:[%s1 + $0x10] sm:$0xff]
      %v241 = vld [vmem:[%s1 + $0x18] sm:$0xff]
      %vm242 = vcmask 261120
      %v244 = vsel %vm242, %v236, 0
      %v247 = vsel %vm242, %v237, 0
      %249 = vmatpush.msra.mxu0 0.0
      %250 = vmatpush.msra.mxu0 0.0
      %251 = vmatpush.msra.mxu0 0.0
      %252 = vmatpush.msra.mxu0 0.0
      %253 = vmatpush.msra.mxu0 0.0
      %254 = vmatpush.msra.mxu0 0.0
      %255 = vmatpush.msra.mxu0 0.0
      %256 = vmatpush.msra.mxu0 0.0
      %257 = vmatpush.msra.mxu0 0.0
      %258 = vmatpush.msra.mxu0 0.0
      %259 = vmatpush.msra.mxu0 0.0
      %260 = vmatpush.msra.mxu0 0.0
      %261 = vmatpush.msra.mxu0 %v241
      %262 = vmatpush.msra.mxu0 %v240
      %263 = vmatpush.msra.mxu0 %v239
      %264 = vmatpush.msra.mxu0 %v238
      %265 = vmatmul.f32.gmra.mxu0 %v244
      %v266 = vpop.f32.mrf.mxu0
      %v267 = vadd.f32 0.0, %v266
      %268 = vmatmul.f32.gmra.mxu0 %v247
      %v269 = vpop.f32.mrf.mxu0
      %v270 = vadd.f32 0.0, %v269
      %271 = vdwg.mxu0
      %v272 = vrot.slane %v267, 3
      %v273 = vrot.slane %v270, 3
      %v274 = vlaneseq
      %v275 = vshrl.u32 %v274, 7
      %vm276 = vcmp.lt.s32.totalorder %v275, 5
      %v277 = vsel %vm276, %v272, %v273
      %v278 = vsel %vm276, %v273, %v272
      %v279 = vadd.s32 %v275, 8
      %vm280 = vcmp.lt.s32.totalorder %v275, 13
      %vm281 = vcmp.lt.s32.totalorder %v279, 13
      %v282 = vsel %vm280, %v277, 0.0
      %v283 = vsel %vm281, %v278, 0.0
      %286 = vrot.lane.b32.xlu0 %v282, 16
      %v287 = vpop.permute.xlu0 %286
      %288 = vrot.lane.b32.xlu0 %v283, 16
      %v289 = vpop.permute.xlu0 %288
      %vm292 = vcmask 130048
      %v293 = vsel %vm292, %v267, %v287
      %v294 = vsel %vm292, %v270, %v289
      %v295 = vld [vmem:[%s2] sm:$0xff]
      %v296 = vld [vmem:[%s2 + $0x8] sm:$0xff]
      %v297 = vld [vmem:[%s2 + $0x10] sm:$0xff]
      %v298 = vld [vmem:[%s2 + $0x18] sm:$0xff]
      %v299 = vld [vmem:[%s3] sm:$0x1]
      %v301 = vperm.slane %v299, 0
      %v304 = vsel %vm242, %v293, 0
      %v307 = vsel %vm242, %v294, 0
      %309 = vmatpush.msra.mxu0 0.0
      %310 = vmatpush.msra.mxu0 0.0
      %311 = vmatpush.msra.mxu0 0.0
      %312 = vmatpush.msra.mxu0 0.0
      %313 = vmatpush.msra.mxu0 0.0
      %314 = vmatpush.msra.mxu0 0.0
      %315 = vmatpush.msra.mxu0 0.0
      %316 = vmatpush.msra.mxu0 0.0
      %317 = vmatpush.msra.mxu0 0.0
      %318 = vmatpush.msra.mxu0 0.0
      %319 = vmatpush.msra.mxu0 0.0
      %320 = vmatpush.msra.mxu0 0.0
      %321 = vmatpush.msra.mxu0 %v298
      %322 = vmatpush.msra.mxu0 %v297
      %323 = vmatpush.msra.mxu0 %v296
      %324 = vmatpush.msra.mxu0 %v295
      %325 = vmatmul.f32.gmra.mxu0 %v304
      %v326 = vpop.f32.mrf.mxu0
      %v327 = vadd.f32 %v301, %v326
      %328 = vmatmul.f32.gmra.mxu0 %v307
      %v329 = vpop.f32.mrf.mxu0
      %v330 = vadd.f32 %v301, %v329
      %331 = vdwg.mxu0
      %v332 = vmax.f32 %v327, 0.0
      %v333 = vmax.f32 %v330, 0.0
      %334 = vst [vmem:[%s231] sm:$0xff] %v332
      %335 = vst [vmem:[%s231 + $0x8] sm:$0xff] %v333
      %v336 = vadd.f32 %v332, %v333
      %v337 = vrot.slane %v336, 4
      %v338 = vadd.f32 %v336, %v337
      %v339 = vrot.slane %v338, 2
      %v340 = vadd.f32 %v338, %v339
      %v341 = vrot.slane %v340, 1
      %v342 = vadd.f32 %v340, %v341
      %v343 = vmul.f32 %v332, %v332
      %v344 = vmul.f32 %v333, %v333
      %v345 = vadd.f32 %v343, %v344
      %v346 = vrot.slane %v345, 4
      %v347 = vadd.f32 %v345, %v346
      %v348 = vrot.slane %v347, 2
      %v349 = vadd.f32 %v347, %v348
      %v350 = vrot.slane %v349, 1
      %v351 = vadd.f32 %v349, %v350
      %vm352 = vcmask 1040384
      %v353 = vsel %vm352, %v342, %v351
      %354 = vst [vmem:[%s235] sm:$0x3] %v353
      %p355 = scmp.lt.s32.totalorder %s17, 1
      %s356 = scalar_select %p355, %s17, 1
      %s357 = smul.addr %s356, 2
      %s358 = smul.addr %s357, 8
      %s359 = scalar_lea.vmem %s4, %s358
      %p360 = scmp.lt.s32.totalorder %s17, 1
      %s361 = scalar_select %p360, %s17, 1
      %s362 = smul.addr %s361, 2
      %s363 = scalar_lea.vmem %s5, %s362
      // Predicated region
      $region37: #{ftdnn_layer_forward.2} parent=35 // pred_check
        %p364 = pneg %p124
      $region38: #{ftdnn_layer_forward.2} parent=35 // pred_check_branch
        %366 = sbr.rel (%p364) target = $region40
      $region39: #{ftdnn_layer_forward.2} parent=35 // pred_region
        _
      $region40: #{ftdnn_layer_forward.2} parent=35 // pred_fallthru
        _
      // Predicated region
      $region41: #{ftdnn_layer_forward.2} parent=35 // pred_check
        %p367 = pneg %p150
      $region42: #{ftdnn_layer_forward.2} parent=35 // pred_check_branch
        %369 = sbr.rel (%p367) target = $region44
      $region43: #{ftdnn_layer_forward.2} parent=35 // pred_region
        _
      $region44: #{ftdnn_layer_forward.2} parent=35 // pred_fallthru
        _
    $region36: #{ftdnn_layer_forward.2} parent=5 // pred_fallthru
      _
    %p370 = scmp.le.s32.totalorder 2, %s12
    // Predicated region
    $region45: #{ftdnn_layer_forward.2} parent=5 // pred_check
      %p371 = pneg %p370
    $region46: #{ftdnn_layer_forward.2} parent=5 // pred_check_branch
      %373 = sbr.rel (%p371) target = $region48
    $region47: #{ftdnn_layer_forward.2} parent=5 // pred_region
      %s374 = ssub.s32 %s12, 2
      // Predicated region
      $region49: #{ftdnn_layer_forward.2} parent=47 // pred_check
        %p375 = pneg %p130
      $region50: #{ftdnn_layer_forward.2} parent=47 // pred_check_branch
        %377 = sbr.rel (%p375) target = $region52
      $region51: #{ftdnn_layer_forward.2} parent=47 // pred_region
        %p378 = scmp.lt.s32.totalorder %s18, 1
        %s379 = scalar_select %p378, %s18, 1
        %s380 = smul.addr %s379, 2
        %s381 = smul.addr %s380, 8
        %s382 = scalar_lea.vmem %s4, %s381
      $region52: #{ftdnn_layer_forward.2} parent=47 // pred_fallthru
        _
      // Predicated region
      $region53: #{ftdnn_layer_forward.2} parent=47 // pred_check
        %p383 = pneg %p156
      $region54: #{ftdnn_layer_forward.2} parent=47 // pred_check_branch
        %385 = sbr.rel (%p383) target = $region56
      $region55: #{ftdnn_layer_forward.2} parent=47 // pred_region
        %p386 = scmp.lt.s32.totalorder %s18, 1
        %s387 = scalar_select %p386, %s18, 1
        %s388 = smul.addr %s387, 2
        %s389 = scalar_lea.vmem %s5, %s388
      $region56: #{ftdnn_layer_forward.2} parent=47 // pred_fallthru
        _
    $region48: #{ftdnn_layer_forward.2} parent=5 // pred_fallthru
      _
  $region6: #{ftdnn_layer_forward.2} parent=0 // loop_footer
    %s16 = sadd.s32 1, %s12
  $region7: #{ftdnn_layer_forward.2} parent=0 // loop_footer_branch
    %11 = sbr.rel target = $region3
  $region8: #{ftdnn_layer_forward.2} parent=0 // loop_exit
    _

</llo_original>
